<compile_context>
chip_gen: v6e
topology: v6e:2x2x1
jax: 0.10.0
libtpu: 0.0.40
codegen_flags: <defaults>
</compile_context>

<pallas_src>
import functools

import jax
import jax.numpy as jnp
from jax.experimental import pallas as pl
from jax.experimental.pallas import tpu as pltpu

_HID = 128          # lane-dense hidden width used for layers 1..4
_EPS = 1e-5
_NEG_BIG = -1e30    # padded-class logit fill (exp underflows to exactly 0)


def _round_up(x, m):
    return ((x + m - 1) // m) * m


def _mlp_kernel(x_ref, w1_ref, wstack_ref, b14_ref, w5_ref, b5_ref,
                logits_ref, probs_ref, *, inv_temperature):
    x = x_ref[...]                      # (TB, D_pad) f32
    b = b14_ref[...]                    # (8, 128) f32; rows 0..3 = BN-folded shifts

    # Layers 1..4: Linear (+BN folded) + ReLU, all 128-lane dense.
    h = jnp.maximum(jnp.dot(x, w1_ref[...], preferred_element_type=jnp.float32) + b[0:1, :], 0.0)
    h = jnp.maximum(jnp.dot(h, wstack_ref[0], preferred_element_type=jnp.float32) + b[1:2, :], 0.0)
    h = jnp.maximum(jnp.dot(h, wstack_ref[1], preferred_element_type=jnp.float32) + b[2:3, :], 0.0)
    h = jnp.maximum(jnp.dot(h, wstack_ref[2], preferred_element_type=jnp.float32) + b[3:4, :], 0.0)

    # Layer 5: narrow (128, C_W) weight -> (TB, C_W) logits.  Padded class lanes get
    # -1e30 from b5, so softmax needs no explicit masking and the writeback is tiny.
    logits = jnp.dot(h, w5_ref[...], preferred_element_type=jnp.float32) + b5_ref[...]
    logits_ref[...] = logits

    z = logits * inv_temperature
    z = z - jnp.max(z, axis=-1, keepdims=True)
    e = jnp.exp(z)                                   # padded lanes underflow to 0
    denom = jnp.sum(e, axis=-1, keepdims=True)
    probs_ref[...] = e * pl.reciprocal(denom, approx=True)


def wine_model_forward(x, packed, *, temperature=1.0, tile_b=None):
    """x: (B, input_dim) f32.  Returns (logits, probs), each (B, num_classes)."""
    B, D = x.shape
    num_classes = packed["num_classes"]
    w1, wstack, b14 = packed["w1"], packed["wstack"], packed["bias14"]
    w5, b5 = packed["w5"], packed["b5"]
    D_pad = w1.shape[0]
    c_w = w5.shape[1]

    if tile_b is None:
        # Big tiles amortize per-step overhead; cap so the grid has >= 2 steps
        # (lets "parallel" shard batch tiles across both v7x TensorCores).
        tile_b = min(2048, _round_up(pl.cdiv(B, 2), 8))
    tile_b = max(8, _round_up(tile_b, 8))
    B_pad = _round_up(B, tile_b)

    xp = x
    if B_pad != B or D_pad != D:
        xp = jnp.pad(x, ((0, B_pad - B), (0, D_pad - D)))

    kernel = functools.partial(_mlp_kernel, inv_temperature=1.0 / float(temperature))

    in_specs = [
        pl.BlockSpec((tile_b, D_pad), lambda i: (i, 0)),
        pl.BlockSpec(w1.shape, lambda i: (0, 0)),
        pl.BlockSpec(wstack.shape, lambda i: (0, 0, 0)),
        pl.BlockSpec(b14.shape, lambda i: (0, 0)),
        pl.BlockSpec(w5.shape, lambda i: (0, 0)),
        pl.BlockSpec(b5.shape, lambda i: (0, 0)),
    ]
    out_specs = (
        pl.BlockSpec((tile_b, c_w), lambda i: (i, 0)),
        pl.BlockSpec((tile_b, c_w), lambda i: (i, 0)),
    )
    out_shape = (
        jax.ShapeDtypeStruct((B_pad, c_w), jnp.float32),   # logits (f32: 1e-4 tolerance)
        jax.ShapeDtypeStruct((B_pad, c_w), jnp.float32),   # probs
    )

    logits_p, probs_p = pl.pallas_call(
        kernel,
        out_shape=out_shape,
        grid_spec=pltpu.PrefetchScalarGridSpec(
            num_scalar_prefetch=0,
            grid=(B_pad // tile_b,),
            in_specs=in_specs,
            out_specs=out_specs,
        ),
        compiler_params=pltpu.CompilerParams(
            dimension_semantics=("parallel",),   # batch tiles shard across v7x's 2 TCs
        ),
    )(xp, w1, wstack, b14, w5, b5)

    return logits_p[:B, :num_classes], probs_p[:B, :num_classes]


def init_params(key, input_dim, num_classes):
    """Raw parameters mirroring the PyTorch module (inference-mode BatchNorm stats)."""
    dims = [input_dim, 128, 64, 32, 16, num_classes]
    params = {}
    keys = jax.random.split(key, 2 * (len(dims) - 1))
    for li in range(len(dims) - 1):
        fan_in, fan_out = dims[li], dims[li + 1]
        bound = 1.0 / (fan_in ** 0.5)
        name = li + 1
        params[f"w{name}"] = jax.random.uniform(
            keys[2 * li], (fan_in, fan_out), minval=-bound, maxval=bound, dtype=jnp.float32)
        params[f"b{name}"] = jax.random.uniform(
            keys[2 * li + 1], (fan_out,), minval=-bound, maxval=bound, dtype=jnp.float32)
        if name <= 4:
            params[f"gamma{name}"] = jnp.ones((fan_out,), jnp.float32)
            params[f"beta{name}"] = jnp.zeros((fan_out,), jnp.float32)
            params[f"rm{name}"] = jnp.zeros((fan_out,), jnp.float32)
            params[f"rv{name}"] = jnp.ones((fan_out,), jnp.float32)
    return params


def pack_params(raw, input_dim, num_classes):
    """Fold BN into the weights and pack everything into a few dense, padded arrays."""
    folded_w, shifts = [], []
    for li in range(1, 5):
        w, b = raw[f"w{li}"], raw[f"b{li}"]
        scale = raw[f"gamma{li}"] / jnp.sqrt(raw[f"rv{li}"] + _EPS)      # (out,)
        shift = scale * (b - raw[f"rm{li}"]) + raw[f"beta{li}"]          # (out,)
        folded_w.append(w * scale)                                       # scale per output column
        shifts.append(shift)

    D_pad = _round_up(input_dim, 8)                     # 13 -> 16 (sublane-aligned K)
    c_w = max(8, _round_up(num_classes, 8))             # narrow output width

    w1 = jnp.pad(folded_w[0], ((0, D_pad - input_dim), (0, 0)))          # (D_pad, 128)

    def pad_w(w):
        fi, fo = w.shape
        return jnp.pad(w, ((0, _HID - fi), (0, _HID - fo)))

    wstack = jnp.stack([pad_w(w) for w in folded_w[1:]])                 # (3, 128, 128)
    bias14_rows = jnp.stack([jnp.pad(s, (0, _HID - s.shape[0])) for s in shifts])  # (4, 128)
    bias14 = jnp.zeros((8, _HID), jnp.float32).at[:4].set(bias14_rows)   # (8, 128)

    w5 = jnp.pad(raw["w5"], ((0, _HID - raw["w5"].shape[0]), (0, c_w - num_classes)))  # (128, c_w)
    # Padded class lanes get -1e30 so exp() kills them without in-kernel masking.
    b5 = jnp.full((1, c_w), _NEG_BIG, jnp.float32).at[0, :num_classes].set(raw["b5"])  # (1, c_w)

    return {"w1": w1, "wstack": wstack, "bias14": bias14, "w5": w5, "b5": b5,
            "num_classes": num_classes}


def reference_forward(x, raw, temperature=1.0):
    """Pure-JAX reference with the un-folded Linear + BatchNorm (eval) + ReLU stack."""
    h = x
    for li in (1, 2, 3, 4):
        y = h @ raw[f"w{li}"] + raw[f"b{li}"]
        y = (y - raw[f"rm{li}"]) / jnp.sqrt(raw[f"rv{li}"] + _EPS) * raw[f"gamma{li}"] + raw[f"beta{li}"]
        h = jnp.maximum(y, 0.0)
    logits = h @ raw["w5"] + raw["b5"]
    probs = jax.nn.softmax(logits / temperature, axis=1)
    return logits, probs


if __name__ == "__main__":
    key = jax.random.PRNGKey(0)
    k_param, k_x = jax.random.split(key)

    # Wine-dataset-ish small shapes: 13 features, 3 classes, ragged batch of 19.
    B, INPUT_DIM, NUM_CLASSES = 19, 13, 3
    raw = init_params(k_param, INPUT_DIM, NUM_CLASSES)
    packed = pack_params(raw, INPUT_DIM, NUM_CLASSES)
    x = jax.random.normal(k_x, (B, INPUT_DIM), dtype=jnp.float32)

    ref_logits, ref_probs = reference_forward(x, raw, temperature=1.0)

    # 1) Default tile selection (grid of 2 steps even at this small B).
    logits, probs = wine_model_forward(x, packed, temperature=1.0)
    # 2) Small explicit tile to exercise the multi-step grid + batch-padding path.
    logits2, probs2 = wine_model_forward(x, packed, temperature=1.0, tile_b=8)
    logits, probs, logits2, probs2 = jax.block_until_ready((logits, probs, logits2, probs2))

    for lg, pr in ((logits, probs), (logits2, probs2)):
        assert lg.shape == (B, NUM_CLASSES) and pr.shape == (B, NUM_CLASSES)
        assert jnp.allclose(lg, ref_logits, atol=1e-4, rtol=1e-4)
        assert jnp.allclose(pr, ref_probs, atol=5e-3, rtol=5e-3)   # approx reciprocal in softmax
        assert jnp.allclose(jnp.sum(pr, axis=1), 1.0, atol=5e-3)

    print("KERNEL_OK")
</pallas_src>

<mosaic_0001>
module attributes {stable_mosaic.version = 11 : i64} {
  func.func @_mlp_kernel(%arg0: i32, %arg1: memref<16x16xf32, #tpu.memory_space<vmem>>, %arg2: memref<16x128xf32, #tpu.memory_space<vmem>>, %arg3: memref<3x128x128xf32, #tpu.memory_space<vmem>>, %arg4: memref<8x128xf32, #tpu.memory_space<vmem>>, %arg5: memref<128x8xf32, #tpu.memory_space<vmem>>, %arg6: memref<1x8xf32, #tpu.memory_space<vmem>>, %arg7: memref<16x8xf32, #tpu.memory_space<vmem>>, %arg8: memref<16x8xf32, #tpu.memory_space<vmem>>) attributes {dimension_semantics = [#tpu.dimension_semantics<parallel>], iteration_bounds = array<i64: 2>, scalar_prefetch = 0 : i64, scratch_operands = 0 : i64, tpu.core_type = #tpu.core_type<tc>, window_params = [{transform_indices = @transform_0, window_bounds = array<i64: 16, 16>}, {pipeline_mode = #tpu.pipeline_mode<synchronous>, transform_indices = @transform_1, window_bounds = array<i64: 16, 128>}, {pipeline_mode = #tpu.pipeline_mode<synchronous>, transform_indices = @transform_2, window_bounds = array<i64: 3, 128, 128>}, {pipeline_mode = #tpu.pipeline_mode<synchronous>, transform_indices = @transform_3, window_bounds = array<i64: 8, 128>}, {pipeline_mode = #tpu.pipeline_mode<synchronous>, transform_indices = @transform_4, window_bounds = array<i64: 128, 8>}, {pipeline_mode = #tpu.pipeline_mode<synchronous>, transform_indices = @transform_5, window_bounds = array<i64: 1, 8>}, {transform_indices = @transform_6, window_bounds = array<i64: 16, 8>}, {transform_indices = @transform_7, window_bounds = array<i64: 16, 8>}]} {
    %c0 = arith.constant 0 : index
    %c0_0 = arith.constant 0 : index
    %0 = vector.load %arg1[%c0, %c0_0] : memref<16x16xf32, #tpu.memory_space<vmem>>, vector<16x16xf32>
    %c0_1 = arith.constant 0 : index
    %c0_2 = arith.constant 0 : index
    %1 = vector.load %arg4[%c0_1, %c0_2] : memref<8x128xf32, #tpu.memory_space<vmem>>, vector<8x128xf32>
    %c0_3 = arith.constant 0 : index
    %c0_4 = arith.constant 0 : index
    %2 = vector.load %arg2[%c0_3, %c0_4] : memref<16x128xf32, #tpu.memory_space<vmem>>, vector<16x128xf32>
    %cst = arith.constant dense<0.000000e+00> : vector<16x128xf32>
    %3 = tpu.matmul %0, %2, %cst {dimension_numbers = #tpu.dot_dimension_numbers<[1], [0], [0], [1], [0, 0, 1, 1], [], []>} : vector<16x16xf32>, vector<16x128xf32>, vector<16x128xf32> -> vector<16x128xf32>
    %4 = vector.extract_strided_slice %1 {offsets = [0, 0], sizes = [1, 128], strides = [1, 1]} : vector<8x128xf32> to vector<1x128xf32>
    %5 = vector.broadcast %4 : vector<1x128xf32> to vector<16x128xf32>
    %6 = arith.addf %3, %5 : vector<16x128xf32>
    %cst_5 = arith.constant 0.000000e+00 : f32
    %7 = vector.broadcast %cst_5 : f32 to vector<16x128xf32>
    %8 = arith.maximumf %6, %7 : vector<16x128xf32>
    %c0_6 = arith.constant 0 : index
    %c0_7 = arith.constant 0 : index
    %c0_8 = arith.constant 0 : index
    %9 = vector.load %arg3[%c0_6, %c0_7, %c0_8] : memref<3x128x128xf32, #tpu.memory_space<vmem>>, vector<1x128x128xf32>
    %10 = vector.shape_cast %9 : vector<1x128x128xf32> to vector<128x128xf32>
    %cst_9 = arith.constant dense<0.000000e+00> : vector<16x128xf32>
    %11 = tpu.matmul %8, %10, %cst_9 {dimension_numbers = #tpu.dot_dimension_numbers<[1], [0], [0], [1], [0, 0, 1, 1], [], []>} : vector<16x128xf32>, vector<128x128xf32>, vector<16x128xf32> -> vector<16x128xf32>
    %12 = vector.extract_strided_slice %1 {offsets = [1, 0], sizes = [1, 128], strides = [1, 1]} : vector<8x128xf32> to vector<1x128xf32>
    %13 = vector.broadcast %12 : vector<1x128xf32> to vector<16x128xf32>
    %14 = arith.addf %11, %13 : vector<16x128xf32>
    %cst_10 = arith.constant 0.000000e+00 : f32
    %15 = vector.broadcast %cst_10 : f32 to vector<16x128xf32>
    %16 = arith.maximumf %14, %15 : vector<16x128xf32>
    %c1 = arith.constant 1 : index
    %c0_11 = arith.constant 0 : index
    %c0_12 = arith.constant 0 : index
    %17 = vector.load %arg3[%c1, %c0_11, %c0_12] : memref<3x128x128xf32, #tpu.memory_space<vmem>>, vector<1x128x128xf32>
    %18 = vector.shape_cast %17 : vector<1x128x128xf32> to vector<128x128xf32>
    %cst_13 = arith.constant dense<0.000000e+00> : vector<16x128xf32>
    %19 = tpu.matmul %16, %18, %cst_13 {dimension_numbers = #tpu.dot_dimension_numbers<[1], [0], [0], [1], [0, 0, 1, 1], [], []>} : vector<16x128xf32>, vector<128x128xf32>, vector<16x128xf32> -> vector<16x128xf32>
    %20 = vector.extract_strided_slice %1 {offsets = [2, 0], sizes = [1, 128], strides = [1, 1]} : vector<8x128xf32> to vector<1x128xf32>
    %21 = vector.broadcast %20 : vector<1x128xf32> to vector<16x128xf32>
    %22 = arith.addf %19, %21 : vector<16x128xf32>
    %cst_14 = arith.constant 0.000000e+00 : f32
    %23 = vector.broadcast %cst_14 : f32 to vector<16x128xf32>
    %24 = arith.maximumf %22, %23 : vector<16x128xf32>
    %c2 = arith.constant 2 : index
    %c0_15 = arith.constant 0 : index
    %c0_16 = arith.constant 0 : index
    %25 = vector.load %arg3[%c2, %c0_15, %c0_16] : memref<3x128x128xf32, #tpu.memory_space<vmem>>, vector<1x128x128xf32>
    %26 = vector.shape_cast %25 : vector<1x128x128xf32> to vector<128x128xf32>
    %cst_17 = arith.constant dense<0.000000e+00> : vector<16x128xf32>
    %27 = tpu.matmul %24, %26, %cst_17 {dimension_numbers = #tpu.dot_dimension_numbers<[1], [0], [0], [1], [0, 0, 1, 1], [], []>} : vector<16x128xf32>, vector<128x128xf32>, vector<16x128xf32> -> vector<16x128xf32>
    %28 = vector.extract_strided_slice %1 {offsets = [3, 0], sizes = [1, 128], strides = [1, 1]} : vector<8x128xf32> to vector<1x128xf32>
    %29 = vector.broadcast %28 : vector<1x128xf32> to vector<16x128xf32>
    %30 = arith.addf %27, %29 : vector<16x128xf32>
    %cst_18 = arith.constant 0.000000e+00 : f32
    %31 = vector.broadcast %cst_18 : f32 to vector<16x128xf32>
    %32 = arith.maximumf %30, %31 : vector<16x128xf32>
    %c0_19 = arith.constant 0 : index
    %c0_20 = arith.constant 0 : index
    %33 = vector.load %arg5[%c0_19, %c0_20] : memref<128x8xf32, #tpu.memory_space<vmem>>, vector<128x8xf32>
    %cst_21 = arith.constant dense<0.000000e+00> : vector<16x8xf32>
    %34 = tpu.matmul %32, %33, %cst_21 {dimension_numbers = #tpu.dot_dimension_numbers<[1], [0], [0], [1], [0, 0, 1, 1], [], []>} : vector<16x128xf32>, vector<128x8xf32>, vector<16x8xf32> -> vector<16x8xf32>
    %c0_22 = arith.constant 0 : index
    %c0_23 = arith.constant 0 : index
    %35 = vector.load %arg6[%c0_22, %c0_23] : memref<1x8xf32, #tpu.memory_space<vmem>>, vector<1x8xf32>
    %36 = vector.broadcast %35 : vector<1x8xf32> to vector<16x8xf32>
    %37 = arith.addf %34, %36 : vector<16x8xf32>
    %c0_24 = arith.constant 0 : index
    %c0_25 = arith.constant 0 : index
    %38 = vector.load %arg7[%c0_24, %c0_25] : memref<16x8xf32, #tpu.memory_space<vmem>>, vector<16x8xf32>
    tpu.vector_store %arg7[%c0_24, %c0_25], %37 {strides = array<i32>} : memref<16x8xf32, #tpu.memory_space<vmem>>, vector<16x8xf32>,
    %cst_26 = arith.constant 1.000000e+00 : f32
    %39 = vector.broadcast %cst_26 : f32 to vector<16x8xf32>
    %40 = arith.mulf %37, %39 : vector<16x8xf32>
    %cst_27 = arith.constant dense<0xFF800000> : vector<16xf32>
    %41 = vector.multi_reduction <maximumf>, %40, %cst_27 [1] : vector<16x8xf32> to vector<16xf32>
    %42 = vector.shape_cast %41 : vector<16xf32> to vector<16x1xf32>
    %43 = vector.broadcast %42 : vector<16x1xf32> to vector<16x8xf32>
    %44 = arith.subf %40, %43 : vector<16x8xf32>
    %45 = math.exp %44 : vector<16x8xf32>
    %cst_28 = arith.constant dense<0.000000e+00> : vector<16xf32>
    %46 = vector.multi_reduction <add>, %45, %cst_28 [1] : vector<16x8xf32> to vector<16xf32>
    %47 = vector.shape_cast %46 : vector<16xf32> to vector<16x1xf32>
    %48 = tpu.reciprocal %47 {approx = true} : vector<16x1xf32> -> vector<16x1xf32>
    %49 = vector.broadcast %48 : vector<16x1xf32> to vector<16x8xf32>
    %50 = arith.mulf %45, %49 : vector<16x8xf32>
    %c0_29 = arith.constant 0 : index
    %c0_30 = arith.constant 0 : index
    %51 = vector.load %arg8[%c0_29, %c0_30] : memref<16x8xf32, #tpu.memory_space<vmem>>, vector<16x8xf32>
    tpu.vector_store %arg8[%c0_29, %c0_30], %50 {strides = array<i32>} : memref<16x8xf32, #tpu.memory_space<vmem>>, vector<16x8xf32>,
    return
  }
  func.func @transform_0(%arg0: i32) -> (i32, i32) {
    %c0_i32 = arith.constant 0 : i32
    %c0_i32_0 = arith.constant 0 : i32
    return %arg0, %c0_i32 : i32, i32
  }
  func.func @transform_1(%arg0: i32) -> (i32, i32) {
    %c0_i32 = arith.constant 0 : i32
    %c0_i32_0 = arith.constant 0 : i32
    %c0_i32_1 = arith.constant 0 : i32
    return %c0_i32, %c0_i32_0 : i32, i32
  }
  func.func @transform_2(%arg0: i32) -> (i32, i32, i32) {
    %c0_i32 = arith.constant 0 : i32
    %c0_i32_0 = arith.constant 0 : i32
    %c0_i32_1 = arith.constant 0 : i32
    %c0_i32_2 = arith.constant 0 : i32
    return %c0_i32, %c0_i32_0, %c0_i32_1 : i32, i32, i32
  }
  func.func @transform_3(%arg0: i32) -> (i32, i32) {
    %c0_i32 = arith.constant 0 : i32
    %c0_i32_0 = arith.constant 0 : i32
    %c0_i32_1 = arith.constant 0 : i32
    return %c0_i32, %c0_i32_0 : i32, i32
  }
  func.func @transform_4(%arg0: i32) -> (i32, i32) {
    %c0_i32 = arith.constant 0 : i32
    %c0_i32_0 = arith.constant 0 : i32
    %c0_i32_1 = arith.constant 0 : i32
    return %c0_i32, %c0_i32_0 : i32, i32
  }
  func.func @transform_5(%arg0: i32) -> (i32, i32) {
    %c0_i32 = arith.constant 0 : i32
    %c0_i32_0 = arith.constant 0 : i32
    %c0_i32_1 = arith.constant 0 : i32
    return %c0_i32, %c0_i32_0 : i32, i32
  }
  func.func @transform_6(%arg0: i32) -> (i32, i32) {
    %c0_i32 = arith.constant 0 : i32
    %c0_i32_0 = arith.constant 0 : i32
    return %arg0, %c0_i32 : i32, i32
  }
  func.func @transform_7(%arg0: i32) -> (i32, i32) {
    %c0_i32 = arith.constant 0 : i32
    %c0_i32_0 = arith.constant 0 : i32
    return %arg0, %c0_i32 : i32, i32
  }
}

</mosaic_0001>

<llo_original>
// kernel: tpu_custom_call.1
$region0: #{tpu_custom_call.1}
  #allocation0 [shape = 'u32[]', space=smem, size = 0x4, offset = 0x4, fixed_abs, tag = 'smem constant byte address 0x4 - core index']
  #allocation1 [shape = 'u32[144,128]{1,0:T(1,128)}', space=vmem, size = 0x12000, scoped, tag = 'internal scratch']
  %s0 = inlined_call_operand.vmem [shape: f32[32,16], index: 0, kind: input, shape index: {}]
  %s1 = inlined_call_operand.vmem [shape: f32[16,128], index: 1, kind: input, shape index: {}]
  %s2 = inlined_call_operand.hbm [shape: f32[3,128,128], index: 2, kind: input, shape index: {}]
  %s3 = inlined_call_operand.vmem [shape: f32[8,128], index: 3, kind: input, shape index: {}]
  %s4 = inlined_call_operand.vmem [shape: f32[128,8], index: 4, kind: input, shape index: {}]
  %s5 = inlined_call_operand.vmem [shape: f32[1,8], index: 5, kind: input, shape index: {}]
  %s6 = inlined_call_operand.vmem [shape: f32[32,8], index: 6, kind: output, shape index: {0}]
  %s7 = inlined_call_operand.vmem [shape: f32[32,8], index: 7, kind: output, shape index: {1}]
  %8 = xla_tuple %s6, %s7
  %s9 = sld [smem:[#allocation0]]
  $region69: #{tpu_custom_call.1} parent=0
    _
  %s11 = ssub.s32 1, %s9
  %s12 = scalar_select 0, %s11, %s9
  $region1: #{tpu_custom_call.1} parent=0
    #allocation2 [shape = 'u8[196608]{0}', space=vmem, size = 0x30000, scoped, tag = 'input window, operand 2, single buffered']
    #allocation3 [shape = 's32[2]{0}', space=sflag, size = 0x8, scoped, tag = 'scoped memory for tpu_custom_call.1']
    %13 = vsyncpa [#allocation3], 0
    loop: start=0, step=1, limit=4
    $region2: #{tpu_custom_call.1} parent=1 // loop_pre_header
      _
    $region3: #{tpu_custom_call.1} parent=1 // loop_header
      %s15 = sphi 0, %s19
      %p16 = scmp.ge.s32.totalorder %s15, 4
      %s25 = sphi 0, %s27
      %s28 = sphi 0, %s25
      %s29 = sphi 0, %s28
      %s45 = sphi 0, %s29
      %s49 = sphi 0, %s49
      %s51 = sphi 0, %s49
      %s52 = sphi 0, %s51
      %s66 = sphi 0, %s52
      %s70 = sphi 0, %s70
      %s72 = sphi 0, %s70
      %s73 = sphi 0, %s72
      %s87 = sphi 0, %s73
      %s91 = sphi 0, %s91
      %s93 = sphi 0, %s91
      %s94 = sphi 0, %s93
      %s108 = sphi 0, %s94
      %s112 = sphi 0, %s112
      %s114 = sphi 0, %s112
      %s115 = sphi 0, %s114
      %s129 = sphi 0, %s115
      %s133 = sphi 0, %s133
      %s135 = sphi 0, %s133
      %s136 = sphi 0, %s135
      %s150 = sphi 0, %s136
      %s156 = sphi 0, %s158
      %s159 = sphi 0, %s156
      %s160 = sphi 0, %s159
      %s176 = sphi 0, %s160
      %s182 = sphi 0, %s184
      %s185 = sphi 0, %s182
      %s186 = sphi 0, %s185
      %s202 = sphi 0, %s186
    $region4: #{tpu_custom_call.1} parent=1 // loop_header_branch
      %18 = sbr.rel (%p16) target = $region8
    $region5: #{tpu_custom_call.1} parent=1 // loop_body
      %s20 = ssub.s32 %s15, 1
      %s21 = ssub.s32 %s15, 2
      %s22 = sadd.s32 %s15, 1
      %s23 = ssub.s32 %s15, %s22
      %p24 = scmp.eq.s32.totalorder %s23, 0
      %s26 = sadd.s32 %s25, 1
      %s27 = scalar_select %p24, %s25, %s26
      %p30 = pneg %p24
      %p31 = scmp.eq.s32.totalorder %s15, 1
      %p32 = por %p30, %p31
      %p33 = scmp.ne.s32.totalorder %s25, %s28
      %p34 = scmp.eq.s32.totalorder %s15, 0
      %p35 = por %p33, %p34
      %p36 = scmp.ne.s32.totalorder %s25, %s28
      %p37 = scmp.eq.s32.totalorder %s20, 1
      %p38 = por %p36, %p37
      %p39 = scmp.ne.s32.totalorder %s28, %s29
      %p40 = scmp.eq.s32.totalorder %s20, 0
      %p41 = por %p39, %p40
      %p42 = scmp.ne.s32.totalorder %s28, %s29
      %p43 = scmp.eq.s32.totalorder %s21, 1
      %p44 = por %p42, %p43
      %p46 = scmp.ne.s32.totalorder %s29, %s45
      %p47 = scmp.eq.s32.totalorder %s21, 0
      %p48 = por %p46, %p47
      %s50 = sadd.s32 %s49, 1
      %p53 = scmp.eq.s32.totalorder %s15, 1
      %p54 = scmp.ne.s32.totalorder %s49, %s51
      %p55 = scmp.eq.s32.totalorder %s15, 0
      %p56 = por %p54, %p55
      %p57 = scmp.ne.s32.totalorder %s49, %s51
      %p58 = scmp.eq.s32.totalorder %s20, 1
      %p59 = por %p57, %p58
      %p60 = scmp.ne.s32.totalorder %s51, %s52
      %p61 = scmp.eq.s32.totalorder %s20, 0
      %p62 = por %p60, %p61
      %p63 = scmp.ne.s32.totalorder %s51, %s52
      %p64 = scmp.eq.s32.totalorder %s21, 1
      %p65 = por %p63, %p64
      %p67 = scmp.ne.s32.totalorder %s52, %s66
      %p68 = scmp.eq.s32.totalorder %s21, 0
      %p69 = por %p67, %p68
      %s71 = sadd.s32 %s70, 1
      %p74 = scmp.eq.s32.totalorder %s15, 1
      %p75 = scmp.ne.s32.totalorder %s70, %s72
      %p76 = scmp.eq.s32.totalorder %s15, 0
      %p77 = por %p75, %p76
      %p78 = scmp.ne.s32.totalorder %s70, %s72
      %p79 = scmp.eq.s32.totalorder %s20, 1
      %p80 = por %p78, %p79
      %p81 = scmp.ne.s32.totalorder %s72, %s73
      %p82 = scmp.eq.s32.totalorder %s20, 0
      %p83 = por %p81, %p82
      %p84 = scmp.ne.s32.totalorder %s72, %s73
      %p85 = scmp.eq.s32.totalorder %s21, 1
      %p86 = por %p84, %p85
      %p88 = scmp.ne.s32.totalorder %s73, %s87
      %p89 = scmp.eq.s32.totalorder %s21, 0
      %p90 = por %p88, %p89
      %s92 = sadd.s32 %s91, 1
      %p95 = scmp.eq.s32.totalorder %s15, 1
      %p96 = scmp.ne.s32.totalorder %s91, %s93
      %p97 = scmp.eq.s32.totalorder %s15, 0
      %p98 = por %p96, %p97
      %p99 = scmp.ne.s32.totalorder %s91, %s93
      %p100 = scmp.eq.s32.totalorder %s20, 1
      %p101 = por %p99, %p100
      %p102 = scmp.ne.s32.totalorder %s93, %s94
      %p103 = scmp.eq.s32.totalorder %s20, 0
      %p104 = por %p102, %p103
      %p105 = scmp.ne.s32.totalorder %s93, %s94
      %p106 = scmp.eq.s32.totalorder %s21, 1
      %p107 = por %p105, %p106
      %p109 = scmp.ne.s32.totalorder %s94, %s108
      %p110 = scmp.eq.s32.totalorder %s21, 0
      %p111 = por %p109, %p110
      %s113 = sadd.s32 %s112, 1
      %p116 = scmp.eq.s32.totalorder %s15, 1
      %p117 = scmp.ne.s32.totalorder %s112, %s114
      %p118 = scmp.eq.s32.totalorder %s15, 0
      %p119 = por %p117, %p118
      %p120 = scmp.ne.s32.totalorder %s112, %s114
      %p121 = scmp.eq.s32.totalorder %s20, 1
      %p122 = por %p120, %p121
      %p123 = scmp.ne.s32.totalorder %s114, %s115
      %p124 = scmp.eq.s32.totalorder %s20, 0
      %p125 = por %p123, %p124
      %p126 = scmp.ne.s32.totalorder %s114, %s115
      %p127 = scmp.eq.s32.totalorder %s21, 1
      %p128 = por %p126, %p127
      %p130 = scmp.ne.s32.totalorder %s115, %s129
      %p131 = scmp.eq.s32.totalorder %s21, 0
      %p132 = por %p130, %p131
      %s134 = sadd.s32 %s133, 1
      %p137 = scmp.eq.s32.totalorder %s15, 1
      %p138 = scmp.ne.s32.totalorder %s133, %s135
      %p139 = scmp.eq.s32.totalorder %s15, 0
      %p140 = por %p138, %p139
      %p141 = scmp.ne.s32.totalorder %s133, %s135
      %p142 = scmp.eq.s32.totalorder %s20, 1
      %p143 = por %p141, %p142
      %p144 = scmp.ne.s32.totalorder %s135, %s136
      %p145 = scmp.eq.s32.totalorder %s20, 0
      %p146 = por %p144, %p145
      %p147 = scmp.ne.s32.totalorder %s135, %s136
      %p148 = scmp.eq.s32.totalorder %s21, 1
      %p149 = por %p147, %p148
      %p151 = scmp.ne.s32.totalorder %s136, %s150
      %p152 = scmp.eq.s32.totalorder %s21, 0
      %p153 = por %p151, %p152
      %s154 = ssub.s32 %s15, %s22
      %p155 = scmp.eq.s32.totalorder %s154, 0
      %s157 = sadd.s32 %s156, 1
      %s158 = scalar_select %p155, %s156, %s157
      %p161 = pneg %p155
      %p162 = scmp.eq.s32.totalorder %s15, 1
      %p163 = por %p161, %p162
      %p164 = scmp.ne.s32.totalorder %s156, %s159
      %p165 = scmp.eq.s32.totalorder %s15, 0
      %p166 = por %p164, %p165
      %p167 = scmp.ne.s32.totalorder %s156, %s159
      %p168 = scmp.eq.s32.totalorder %s20, 1
      %p169 = por %p167, %p168
      %p170 = scmp.ne.s32.totalorder %s159, %s160
      %p171 = scmp.eq.s32.totalorder %s20, 0
      %p172 = por %p170, %p171
      %p173 = scmp.ne.s32.totalorder %s159, %s160
      %p174 = scmp.eq.s32.totalorder %s21, 1
      %p175 = por %p173, %p174
      %p177 = scmp.ne.s32.totalorder %s160, %s176
      %p178 = scmp.eq.s32.totalorder %s21, 0
      %p179 = por %p177, %p178
      %s180 = ssub.s32 %s15, %s22
      %p181 = scmp.eq.s32.totalorder %s180, 0
      %s183 = sadd.s32 %s182, 1
      %s184 = scalar_select %p181, %s182, %s183
      %p187 = pneg %p181
      %p188 = scmp.eq.s32.totalorder %s15, 1
      %p189 = por %p187, %p188
      %p190 = scmp.ne.s32.totalorder %s182, %s185
      %p191 = scmp.eq.s32.totalorder %s15, 0
      %p192 = por %p190, %p191
      %p193 = scmp.ne.s32.totalorder %s182, %s185
      %p194 = scmp.eq.s32.totalorder %s20, 1
      %p195 = por %p193, %p194
      %p196 = scmp.ne.s32.totalorder %s185, %s186
      %p197 = scmp.eq.s32.totalorder %s20, 0
      %p198 = por %p196, %p197
      %p199 = scmp.ne.s32.totalorder %s185, %s186
      %p200 = scmp.eq.s32.totalorder %s21, 1
      %p201 = por %p199, %p200
      %p203 = scmp.ne.s32.totalorder %s186, %s202
      %p204 = scmp.eq.s32.totalorder %s21, 0
      %p205 = por %p203, %p204
      %p206 = scmp.le.s32.totalorder 1, %s15
      %p207 = scmp.lt.s32.totalorder %s15, 3
      %p208 = pnand %p206, %p207
      %p209 = pneg %p208
      // Predicated region
      $region9: #{tpu_custom_call.1} parent=5 // pred_check
        _
      $region10: #{tpu_custom_call.1} parent=5 // pred_check_branch
        %211 = sbr.rel (%p208) target = $region12
      $region11: #{tpu_custom_call.1} parent=5 // pred_region
        %s212 = ssub.s32 %s15, 1
        // Predicated region
        $region13: #{tpu_custom_call.1} parent=11 // pred_check
          %p213 = pneg %p62
        $region14: #{tpu_custom_call.1} parent=11 // pred_check_branch
          %215 = sbr.rel (%p213) target = $region16
        $region15: #{tpu_custom_call.1} parent=11 // pred_region
          _
        $region16: #{tpu_custom_call.1} parent=11 // pred_fallthru
          _
        // Predicated region
        $region17: #{tpu_custom_call.1} parent=11 // pred_check
          %p216 = pneg %p83
        $region18: #{tpu_custom_call.1} parent=11 // pred_check_branch
          %218 = sbr.rel (%p216) target = $region20
        $region19: #{tpu_custom_call.1} parent=11 // pred_region
          %s220 = ssub.s32 6144, 6144
          %221 = vsyncadd [#allocation3], %s220
          %s222 = sshll.u32 [#allocation2], 4
          %s223 = int_to_ptr.vmem [resolvable:$true] %s222
          %228 = dma.hbm_to_vmem [thread:$0]  %s2, 6144, %s223, [#allocation3], 128, 128, 8
        $region20: #{tpu_custom_call.1} parent=11 // pred_fallthru
          _
        // Predicated region
        $region21: #{tpu_custom_call.1} parent=11 // pred_check
          %p229 = pneg %p104
        $region22: #{tpu_custom_call.1} parent=11 // pred_check_branch
          %231 = sbr.rel (%p229) target = $region24
        $region23: #{tpu_custom_call.1} parent=11 // pred_region
          _
        $region24: #{tpu_custom_call.1} parent=11 // pred_fallthru
          _
        // Predicated region
        $region25: #{tpu_custom_call.1} parent=11 // pred_check
          %p232 = pneg %p125
        $region26: #{tpu_custom_call.1} parent=11 // pred_check_branch
          %234 = sbr.rel (%p232) target = $region28
        $region27: #{tpu_custom_call.1} parent=11 // pred_region
          _
        $region28: #{tpu_custom_call.1} parent=11 // pred_fallthru
          _
        // Predicated region
        $region29: #{tpu_custom_call.1} parent=11 // pred_check
          %p235 = pneg %p146
        $region30: #{tpu_custom_call.1} parent=11 // pred_check_branch
          %237 = sbr.rel (%p235) target = $region32
        $region31: #{tpu_custom_call.1} parent=11 // pred_region
          _
        $region32: #{tpu_custom_call.1} parent=11 // pred_fallthru
          _
      $region12: #{tpu_custom_call.1} parent=5 // pred_fallthru
        _
      %p238 = scmp.lt.s32.totalorder %s15, 2
      // Predicated region
      $region33: #{tpu_custom_call.1} parent=5 // pred_check
        %p239 = pneg %p238
      $region34: #{tpu_custom_call.1} parent=5 // pred_check_branch
        %241 = sbr.rel (%p239) target = $region36
      $region35: #{tpu_custom_call.1} parent=5 // pred_region
        // Predicated region
        $region37: #{tpu_custom_call.1} parent=35 // pred_check
          %p242 = pneg %p35
        $region38: #{tpu_custom_call.1} parent=35 // pred_check_branch
          %244 = sbr.rel (%p242) target = $region40
        $region39: #{tpu_custom_call.1} parent=35 // pred_region
          %s245 = smul.u32 2, %s15
          %p246 = scmp.lt.s32.totalorder %s245, 3
          %s247 = scalar_select %p246, %s245, 3
          %s248 = smul.addr %s247, 8
          %s249 = scalar_lea.vmem %s0, %s248
          %s250 = smul.u32 2, %s15
        $region40: #{tpu_custom_call.1} parent=35 // pred_fallthru
          _
      $region36: #{tpu_custom_call.1} parent=5 // pred_fallthru
        _
      %p251 = scmp.le.s32.totalorder 1, %s15
      %p252 = scmp.lt.s32.totalorder %s15, 3
      %p253 = pnand %p251, %p252
      %p254 = pneg %p253
      // Predicated region
      $region41: #{tpu_custom_call.1} parent=5 // pred_check
        _
      $region42: #{tpu_custom_call.1} parent=5 // pred_check_branch
        %256 = sbr.rel (%p253) target = $region44
      $region43: #{tpu_custom_call.1} parent=5 // pred_region
        %s257 = ssub.s32 %s15, 1
        // Predicated region
        $region45: #{tpu_custom_call.1} parent=43 // pred_check
          %p258 = pneg %p83
        $region46: #{tpu_custom_call.1} parent=43 // pred_check_branch
          %260 = sbr.rel (%p258) target = $region48
        $region47: #{tpu_custom_call.1} parent=43 // pred_region
          %261 = dma.done [#allocation3], 6144
        $region48: #{tpu_custom_call.1} parent=43 // pred_fallthru
          _
        %s262 = smul.u32 2, %s20
        %p263 = scmp.lt.s32.totalorder %s262, 3
        %s264 = scalar_select %p263, %s262, 3
        %s265 = smul.addr %s264, 8
        %s266 = scalar_lea.vmem %s0, %s265
        %p267 = pneg %p41
        %p268 = pneg %p38
        %p269 = pneg %p62
        %p270 = pneg %p59
        %p271 = pneg %p83
        %p272 = pneg %p80
        %p273 = pneg %p104
        %p274 = pneg %p101
        %p275 = pneg %p125
        %p276 = pneg %p122
        %p277 = pneg %p146
        %p278 = pneg %p143
        %p279 = pneg %p172
        %p280 = pneg %p169
        %s281 = smul.u32 2, %s20
        %p282 = scmp.lt.s32.totalorder %s281, 3
        %s283 = scalar_select %p282, %s281, 3
        %s284 = smul.addr %s283, 8
        %s285 = scalar_lea.vmem %s6, %s284
        %p286 = pneg %p198
        %p287 = pneg %p195
        %s288 = smul.u32 2, %s20
        %p289 = scmp.lt.s32.totalorder %s288, 3
        %s290 = scalar_select %p289, %s288, 3
        %s291 = smul.addr %s290, 8
        %s292 = scalar_lea.vmem %s7, %s291
        %s293 = smul.u32 2, %s20
        %p294 = scmp.lt.s32.totalorder %s293, 3
        %s295 = scalar_select %p294, %s293, 3
        %s296 = smul.addr %s295, 8
        %s297 = scalar_lea.vmem %s0, %s296
        %s298 = smul.u32 2, %s20
        %s299 = smul.u32 2, %s20
        %p300 = scmp.lt.s32.totalorder %s299, 3
        %s301 = scalar_select %p300, %s299, 3
        %s302 = smul.addr %s301, 8
        %s303 = scalar_lea.vmem %s6, %s302
        %s304 = smul.u32 2, %s20
        %s305 = smul.u32 2, %s20
        %p306 = scmp.lt.s32.totalorder %s305, 3
        %s307 = scalar_select %p306, %s305, 3
        %s308 = smul.addr %s307, 8
        %s309 = scalar_lea.vmem %s7, %s308
        %s310 = smul.u32 2, %s20
        %v311 = vld [vmem:[%s297] sm:$0xff]
        %v312 = vld [vmem:[%s297 + $0x8] sm:$0xff]
        %v313 = vld [vmem:[%s3] sm:$0xff]
        %v314 = vld [vmem:[%s1] sm:$0xff]
        %v315 = vld [vmem:[%s1 + $0x8] sm:$0xff]
        %v316 = vlaneseq
        %v317 = vshrl.u32 %v316, 7
        %v318 = vsub.s32 0, %v317
        %v319 = vrot.slane %v313, %v318
        %vm320 = vcmask 130048
        %v322 = vsel %vm320, %v311, 0
        %v325 = vsel %vm320, %v312, 0
        %327 = vmatprep.subr.mxu0 0.0
        %328 = vmatpush1.msra.mxu0 0.0
        %329 = vmatprep.subr.mxu0 0.0
        %330 = vmatpush1.msra.mxu0 0.0
        %331 = vmatprep.subr.mxu0 0.0
        %332 = vmatpush1.msra.mxu0 0.0
        %333 = vmatprep.subr.mxu0 0.0
        %334 = vmatpush1.msra.mxu0 0.0
        %335 = vmatprep.subr.mxu0 0.0
        %336 = vmatpush1.msra.mxu0 0.0
        %337 = vmatprep.subr.mxu0 0.0
        %338 = vmatpush1.msra.mxu0 0.0
        %339 = vmatprep.subr.mxu0 0.0
        %340 = vmatpush1.msra.mxu0 0.0
        %341 = vmatprep.subr.mxu0 0.0
        %342 = vmatpush1.msra.mxu0 0.0
        %343 = vmatprep.subr.mxu0 0.0
        %344 = vmatpush1.msra.mxu0 0.0
        %345 = vmatprep.subr.mxu0 0.0
        %346 = vmatpush1.msra.mxu0 0.0
        %347 = vmatprep.subr.mxu0 0.0
        %348 = vmatpush1.msra.mxu0 0.0
        %349 = vmatprep.subr.mxu0 0.0
        %350 = vmatpush1.msra.mxu0 0.0
        %351 = vmatprep.subr.mxu0 0.0
        %352 = vmatpush1.msra.mxu0 0.0
        %353 = vmatprep.subr.mxu0 0.0
        %354 = vmatpush1.msra.mxu0 0.0
        %355 = vmatprep.subr.mxu0 0.0
        %356 = vmatpush1.msra.mxu0 %v315
        %357 = vmatprep.subr.mxu0 0.0
        %358 = vmatpush1.msra.mxu0 %v314
        %359 = vmatprep.subr.mxu0 0.0
        %360 = vmatpush2.msra.mxu0 0.0
        %361 = vmatprep.subr.mxu0 0.0
        %362 = vmatpush2.msra.mxu0 0.0
        %363 = vmatprep.subr.mxu0 0.0
        %364 = vmatpush2.msra.mxu0 0.0
        %365 = vmatprep.subr.mxu0 0.0
        %366 = vmatpush2.msra.mxu0 0.0
        %367 = vmatprep.subr.mxu0 0.0
        %368 = vmatpush2.msra.mxu0 0.0
        %369 = vmatprep.subr.mxu0 0.0
        %370 = vmatpush2.msra.mxu0 0.0
        %371 = vmatprep.subr.mxu0 0.0
        %372 = vmatpush2.msra.mxu0 0.0
        %373 = vmatprep.subr.mxu0 0.0
        %374 = vmatpush2.msra.mxu0 0.0
        %375 = vmatprep.subr.mxu0 0.0
        %376 = vmatpush2.msra.mxu0 0.0
        %377 = vmatprep.subr.mxu0 0.0
        %378 = vmatpush2.msra.mxu0 0.0
        %379 = vmatprep.subr.mxu0 0.0
        %380 = vmatpush2.msra.mxu0 0.0
        %381 = vmatprep.subr.mxu0 0.0
        %382 = vmatpush2.msra.mxu0 0.0
        %383 = vmatprep.subr.mxu0 0.0
        %384 = vmatpush2.msra.mxu0 0.0
        %385 = vmatprep.subr.mxu0 0.0
        %386 = vmatpush2.msra.mxu0 0.0
        %387 = vmatprep.subr.mxu0 0.0
        %388 = vmatpush2.msra.mxu0 0.0
        %389 = vmatprep.subr.mxu0 0.0
        %390 = vmatpush2.msra.mxu0 0.0
        %391 = vmatprep.mubr.f32.mxu0 0.0
        %392 = vmatmul.mubr.f32.gmra.mxu0 %v322
        %v393 = vpop.f32.mrf.mxu0
        %v394 = vadd.f32 %v319, %v393
        %v395 = vpop.f32.mrf.mxu0
        %396 = vmatprep.mubr.f32.mxu0 0.0
        %397 = vmatmul.mubr.f32.gmra.mxu0 %v325
        %v398 = vpop.f32.mrf.mxu0
        %v399 = vadd.f32 %v319, %v398
        %v400 = vpop.f32.mrf.mxu0
        %401 = vdwg.mxu0
        %v402 = vmax.f32 %v394, 0.0
        %v403 = vmax.f32 %v399, 0.0
        %v404 = vld [vmem:[#allocation2] sm:$0xff]
        %v405 = vld [vmem:[#allocation2 + $0x8] sm:$0xff]
        %v406 = vld [vmem:[#allocation2 + $0x10] sm:$0xff]
        %v407 = vld [vmem:[#allocation2 + $0x18] sm:$0xff]
        %v408 = vld [vmem:[#allocation2 + $0x20] sm:$0xff]
        %v409 = vld [vmem:[#allocation2 + $0x28] sm:$0xff]
        %v410 = vld [vmem:[#allocation2 + $0x30] sm:$0xff]
        %v411 = vld [vmem:[#allocation2 + $0x38] sm:$0xff]
        %v412 = vld [vmem:[#allocation2 + $0x40] sm:$0xff]
        %v413 = vld [vmem:[#allocation2 + $0x48] sm:$0xff]
        %v414 = vld [vmem:[#allocation2 + $0x50] sm:$0xff]
        %v415 = vld [vmem:[#allocation2 + $0x58] sm:$0xff]
        %v416 = vld [vmem:[#allocation2 + $0x60] sm:$0xff]
        %v417 = vld [vmem:[#allocation2 + $0x68] sm:$0xff]
        %v418 = vld [vmem:[#allocation2 + $0x70] sm:$0xff]
        %v419 = vld [vmem:[#allocation2 + $0x78] sm:$0xff]
        %v420 = vlaneseq
        %v421 = vshrl.u32 %v420, 7
        %v422 = vsub.s32 1, %v421
        %v423 = vrot.slane %v313, %v422
        %424 = vmatprep.subr.mxu0 0.0
        %425 = vmatpush1.msra.mxu0 %v419
        %426 = vmatprep.subr.mxu0 0.0
        %427 = vmatpush1.msra.mxu0 %v418
        %428 = vmatprep.subr.mxu0 0.0
        %429 = vmatpush1.msra.mxu0 %v417
        %430 = vmatprep.subr.mxu0 0.0
        %431 = vmatpush1.msra.mxu0 %v416
        %432 = vmatprep.subr.mxu0 0.0
        %433 = vmatpush1.msra.mxu0 %v415
        %434 = vmatprep.subr.mxu0 0.0
        %435 = vmatpush1.msra.mxu0 %v414
        %436 = vmatprep.subr.mxu0 0.0
        %437 = vmatpush1.msra.mxu0 %v413
        %438 = vmatprep.subr.mxu0 0.0
        %439 = vmatpush1.msra.mxu0 %v412
        %440 = vmatprep.subr.mxu0 0.0
        %441 = vmatpush1.msra.mxu0 %v411
        %442 = vmatprep.subr.mxu0 0.0
        %443 = vmatpush1.msra.mxu0 %v410
        %444 = vmatprep.subr.mxu0 0.0
        %445 = vmatpush1.msra.mxu0 %v409
        %446 = vmatprep.subr.mxu0 0.0
        %447 = vmatpush1.msra.mxu0 %v408
        %448 = vmatprep.subr.mxu0 0.0
        %449 = vmatpush1.msra.mxu0 %v407
        %450 = vmatprep.subr.mxu0 0.0
        %451 = vmatpush1.msra.mxu0 %v406
        %452 = vmatprep.subr.mxu0 0.0
        %453 = vmatpush1.msra.mxu0 %v405
        %454 = vmatprep.subr.mxu0 0.0
        %455 = vmatpush1.msra.mxu0 %v404
        %456 = vmatprep.subr.mxu0 0.0
        %457 = vmatpush2.msra.mxu0 0.0
        %458 = vmatprep.subr.mxu0 0.0
        %459 = vmatpush2.msra.mxu0 0.0
        %460 = vmatprep.subr.mxu0 0.0
        %461 = vmatpush2.msra.mxu0 0.0
        %462 = vmatprep.subr.mxu0 0.0
        %463 = vmatpush2.msra.mxu0 0.0
        %464 = vmatprep.subr.mxu0 0.0
        %465 = vmatpush2.msra.mxu0 0.0
        %466 = vmatprep.subr.mxu0 0.0
        %467 = vmatpush2.msra.mxu0 0.0
        %468 = vmatprep.subr.mxu0 0.0
        %469 = vmatpush2.msra.mxu0 0.0
        %470 = vmatprep.subr.mxu0 0.0
        %471 = vmatpush2.msra.mxu0 0.0
        %472 = vmatprep.subr.mxu0 0.0
        %473 = vmatpush2.msra.mxu0 0.0
        %474 = vmatprep.subr.mxu0 0.0
        %475 = vmatpush2.msra.mxu0 0.0
        %476 = vmatprep.subr.mxu0 0.0
        %477 = vmatpush2.msra.mxu0 0.0
        %478 = vmatprep.subr.mxu0 0.0
        %479 = vmatpush2.msra.mxu0 0.0
        %480 = vmatprep.subr.mxu0 0.0
        %481 = vmatpush2.msra.mxu0 0.0
        %482 = vmatprep.subr.mxu0 0.0
        %483 = vmatpush2.msra.mxu0 0.0
        %484 = vmatprep.subr.mxu0 0.0
        %485 = vmatpush2.msra.mxu0 0.0
        %486 = vmatprep.subr.mxu0 0.0
        %487 = vmatpush2.msra.mxu0 0.0
        %488 = vmatprep.mubr.f32.mxu0 0.0
        %489 = vmatmul.mubr.f32.gmra.mxu0 %v402
        %v490 = vpop.f32.mrf.mxu0
        %v491 = vadd.f32 %v423, %v490
        %v492 = vpop.f32.mrf.mxu0
        %493 = vmatprep.mubr.f32.mxu0 0.0
        %494 = vmatmul.mubr.f32.gmra.mxu0 %v403
        %v495 = vpop.f32.mrf.mxu0
        %v496 = vadd.f32 %v423, %v495
        %v497 = vpop.f32.mrf.mxu0
        %498 = vdwg.mxu0
        %v499 = vmax.f32 %v491, 0.0
        %v500 = vmax.f32 %v496, 0.0
        %s501 = scalar_lea.vmem [#allocation2], 128
        %v502 = vld [vmem:[%s501] sm:$0xff]
        %v503 = vld [vmem:[%s501 + $0x8] sm:$0xff]
        %v504 = vld [vmem:[%s501 + $0x10] sm:$0xff]
        %v505 = vld [vmem:[%s501 + $0x18] sm:$0xff]
        %v506 = vld [vmem:[%s501 + $0x20] sm:$0xff]
        %v507 = vld [vmem:[%s501 + $0x28] sm:$0xff]
        %v508 = vld [vmem:[%s501 + $0x30] sm:$0xff]
        %v509 = vld [vmem:[%s501 + $0x38] sm:$0xff]
        %v510 = vld [vmem:[%s501 + $0x40] sm:$0xff]
        %v511 = vld [vmem:[%s501 + $0x48] sm:$0xff]
        %v512 = vld [vmem:[%s501 + $0x50] sm:$0xff]
        %v513 = vld [vmem:[%s501 + $0x58] sm:$0xff]
        %v514 = vld [vmem:[%s501 + $0x60] sm:$0xff]
        %v515 = vld [vmem:[%s501 + $0x68] sm:$0xff]
        %v516 = vld [vmem:[%s501 + $0x70] sm:$0xff]
        %v517 = vld [vmem:[%s501 + $0x78] sm:$0xff]
        %v518 = vlaneseq
        %v519 = vshrl.u32 %v518, 7
        %v520 = vsub.s32 2, %v519
        %v521 = vrot.slane %v313, %v520
        %522 = vmatprep.subr.mxu0 0.0
        %523 = vmatpush1.msra.mxu0 %v517
        %524 = vmatprep.subr.mxu0 0.0
        %525 = vmatpush1.msra.mxu0 %v516
        %526 = vmatprep.subr.mxu0 0.0
        %527 = vmatpush1.msra.mxu0 %v515
        %528 = vmatprep.subr.mxu0 0.0
        %529 = vmatpush1.msra.mxu0 %v514
        %530 = vmatprep.subr.mxu0 0.0
        %531 = vmatpush1.msra.mxu0 %v513
        %532 = vmatprep.subr.mxu0 0.0
        %533 = vmatpush1.msra.mxu0 %v512
        %534 = vmatprep.subr.mxu0 0.0
        %535 = vmatpush1.msra.mxu0 %v511
        %536 = vmatprep.subr.mxu0 0.0
        %537 = vmatpush1.msra.mxu0 %v510
        %538 = vmatprep.subr.mxu0 0.0
        %539 = vmatpush1.msra.mxu0 %v509
        %540 = vmatprep.subr.mxu0 0.0
        %541 = vmatpush1.msra.mxu0 %v508
        %542 = vmatprep.subr.mxu0 0.0
        %543 = vmatpush1.msra.mxu0 %v507
        %544 = vmatprep.subr.mxu0 0.0
        %545 = vmatpush1.msra.mxu0 %v506
        %546 = vmatprep.subr.mxu0 0.0
        %547 = vmatpush1.msra.mxu0 %v505
        %548 = vmatprep.subr.mxu0 0.0
        %549 = vmatpush1.msra.mxu0 %v504
        %550 = vmatprep.subr.mxu0 0.0
        %551 = vmatpush1.msra.mxu0 %v503
        %552 = vmatprep.subr.mxu0 0.0
        %553 = vmatpush1.msra.mxu0 %v502
        %554 = vmatprep.subr.mxu0 0.0
        %555 = vmatpush2.msra.mxu0 0.0
        %556 = vmatprep.subr.mxu0 0.0
        %557 = vmatpush2.msra.mxu0 0.0
        %558 = vmatprep.subr.mxu0 0.0
        %559 = vmatpush2.msra.mxu0 0.0
        %560 = vmatprep.subr.mxu0 0.0
        %561 = vmatpush2.msra.mxu0 0.0
        %562 = vmatprep.subr.mxu0 0.0
        %563 = vmatpush2.msra.mxu0 0.0
        %564 = vmatprep.subr.mxu0 0.0
        %565 = vmatpush2.msra.mxu0 0.0
        %566 = vmatprep.subr.mxu0 0.0
        %567 = vmatpush2.msra.mxu0 0.0
        %568 = vmatprep.subr.mxu0 0.0
        %569 = vmatpush2.msra.mxu0 0.0
        %570 = vmatprep.subr.mxu0 0.0
        %571 = vmatpush2.msra.mxu0 0.0
        %572 = vmatprep.subr.mxu0 0.0
        %573 = vmatpush2.msra.mxu0 0.0
        %574 = vmatprep.subr.mxu0 0.0
        %575 = vmatpush2.msra.mxu0 0.0
        %576 = vmatprep.subr.mxu0 0.0
        %577 = vmatpush2.msra.mxu0 0.0
        %578 = vmatprep.subr.mxu0 0.0
        %579 = vmatpush2.msra.mxu0 0.0
        %580 = vmatprep.subr.mxu0 0.0
        %581 = vmatpush2.msra.mxu0 0.0
        %582 = vmatprep.subr.mxu0 0.0
        %583 = vmatpush2.msra.mxu0 0.0
        %584 = vmatprep.subr.mxu0 0.0
        %585 = vmatpush2.msra.mxu0 0.0
        %586 = vmatprep.mubr.f32.mxu0 0.0
        %587 = vmatmul.mubr.f32.gmra.mxu0 %v499
        %v588 = vpop.f32.mrf.mxu0
        %v589 = vadd.f32 %v521, %v588
        %v590 = vpop.f32.mrf.mxu0
        %591 = vmatprep.mubr.f32.mxu0 0.0
        %592 = vmatmul.mubr.f32.gmra.mxu0 %v500
        %v593 = vpop.f32.mrf.mxu0
        %v594 = vadd.f32 %v521, %v593
        %v595 = vpop.f32.mrf.mxu0
        %596 = vdwg.mxu0
        %v597 = vmax.f32 %v589, 0.0
        %v598 = vmax.f32 %v594, 0.0
        %s599 = scalar_lea.vmem [#allocation2], 256
        %v600 = vld [vmem:[%s599] sm:$0xff]
        %v601 = vld [vmem:[%s599 + $0x8] sm:$0xff]
        %v602 = vld [vmem:[%s599 + $0x10] sm:$0xff]
        %v603 = vld [vmem:[%s599 + $0x18] sm:$0xff]
        %v604 = vld [vmem:[%s599 + $0x20] sm:$0xff]
        %v605 = vld [vmem:[%s599 + $0x28] sm:$0xff]
        %v606 = vld [vmem:[%s599 + $0x30] sm:$0xff]
        %v607 = vld [vmem:[%s599 + $0x38] sm:$0xff]
        %v608 = vld [vmem:[%s599 + $0x40] sm:$0xff]
        %v609 = vld [vmem:[%s599 + $0x48] sm:$0xff]
        %v610 = vld [vmem:[%s599 + $0x50] sm:$0xff]
        %v611 = vld [vmem:[%s599 + $0x58] sm:$0xff]
        %v612 = vld [vmem:[%s599 + $0x60] sm:$0xff]
        %v613 = vld [vmem:[%s599 + $0x68] sm:$0xff]
        %v614 = vld [vmem:[%s599 + $0x70] sm:$0xff]
        %v615 = vld [vmem:[%s599 + $0x78] sm:$0xff]
        %v616 = vlaneseq
        %v617 = vshrl.u32 %v616, 7
        %v618 = vsub.s32 3, %v617
        %v619 = vrot.slane %v313, %v618
        %620 = vmatprep.subr.mxu0 0.0
        %621 = vmatpush1.msra.mxu0 %v615
        %622 = vmatprep.subr.mxu0 0.0
        %623 = vmatpush1.msra.mxu0 %v614
        %624 = vmatprep.subr.mxu0 0.0
        %625 = vmatpush1.msra.mxu0 %v613
        %626 = vmatprep.subr.mxu0 0.0
        %627 = vmatpush1.msra.mxu0 %v612
        %628 = vmatprep.subr.mxu0 0.0
        %629 = vmatpush1.msra.mxu0 %v611
        %630 = vmatprep.subr.mxu0 0.0
        %631 = vmatpush1.msra.mxu0 %v610
        %632 = vmatprep.subr.mxu0 0.0
        %633 = vmatpush1.msra.mxu0 %v609
        %634 = vmatprep.subr.mxu0 0.0
        %635 = vmatpush1.msra.mxu0 %v608
        %636 = vmatprep.subr.mxu0 0.0
        %637 = vmatpush1.msra.mxu0 %v607
        %638 = vmatprep.subr.mxu0 0.0
        %639 = vmatpush1.msra.mxu0 %v606
        %640 = vmatprep.subr.mxu0 0.0
        %641 = vmatpush1.msra.mxu0 %v605
        %642 = vmatprep.subr.mxu0 0.0
        %643 = vmatpush1.msra.mxu0 %v604
        %644 = vmatprep.subr.mxu0 0.0
        %645 = vmatpush1.msra.mxu0 %v603
        %646 = vmatprep.subr.mxu0 0.0
        %647 = vmatpush1.msra.mxu0 %v602
        %648 = vmatprep.subr.mxu0 0.0
        %649 = vmatpush1.msra.mxu0 %v601
        %650 = vmatprep.subr.mxu0 0.0
        %651 = vmatpush1.msra.mxu0 %v600
        %652 = vmatprep.subr.mxu0 0.0
        %653 = vmatpush2.msra.mxu0 0.0
        %654 = vmatprep.subr.mxu0 0.0
        %655 = vmatpush2.msra.mxu0 0.0
        %656 = vmatprep.subr.mxu0 0.0
        %657 = vmatpush2.msra.mxu0 0.0
        %658 = vmatprep.subr.mxu0 0.0
        %659 = vmatpush2.msra.mxu0 0.0
        %660 = vmatprep.subr.mxu0 0.0
        %661 = vmatpush2.msra.mxu0 0.0
        %662 = vmatprep.subr.mxu0 0.0
        %663 = vmatpush2.msra.mxu0 0.0
        %664 = vmatprep.subr.mxu0 0.0
        %665 = vmatpush2.msra.mxu0 0.0
        %666 = vmatprep.subr.mxu0 0.0
        %667 = vmatpush2.msra.mxu0 0.0
        %668 = vmatprep.subr.mxu0 0.0
        %669 = vmatpush2.msra.mxu0 0.0
        %670 = vmatprep.subr.mxu0 0.0
        %671 = vmatpush2.msra.mxu0 0.0
        %672 = vmatprep.subr.mxu0 0.0
        %673 = vmatpush2.msra.mxu0 0.0
        %674 = vmatprep.subr.mxu0 0.0
        %675 = vmatpush2.msra.mxu0 0.0
        %676 = vmatprep.subr.mxu0 0.0
        %677 = vmatpush2.msra.mxu0 0.0
        %678 = vmatprep.subr.mxu0 0.0
        %679 = vmatpush2.msra.mxu0 0.0
        %680 = vmatprep.subr.mxu0 0.0
        %681 = vmatpush2.msra.mxu0 0.0
        %682 = vmatprep.subr.mxu0 0.0
        %683 = vmatpush2.msra.mxu0 0.0
        %684 = vmatprep.mubr.f32.mxu0 0.0
        %685 = vmatmul.mubr.f32.gmra.mxu0 %v597
        %v686 = vpop.f32.mrf.mxu0
        %v687 = vadd.f32 %v619, %v686
        %v688 = vpop.f32.mrf.mxu0
        %689 = vmatprep.mubr.f32.mxu0 0.0
        %690 = vmatmul.mubr.f32.gmra.mxu0 %v598
        %v691 = vpop.f32.mrf.mxu0
        %v692 = vadd.f32 %v619, %v691
        %v693 = vpop.f32.mrf.mxu0
        %694 = vdwg.mxu0
        %v695 = vmax.f32 %v687, 0.0
        %v696 = vmax.f32 %v692, 0.0
        %v697 = vld [vmem:[%s4] sm:$0xff]
        %v698 = vld [vmem:[%s4 + $0x8] sm:$0xff]
        %v699 = vld [vmem:[%s4 + $0x10] sm:$0xff]
        %v700 = vld [vmem:[%s4 + $0x18] sm:$0xff]
        %v701 = vld [vmem:[%s4 + $0x20] sm:$0xff]
        %v702 = vld [vmem:[%s4 + $0x28] sm:$0xff]
        %v703 = vld [vmem:[%s4 + $0x30] sm:$0xff]
        %v704 = vld [vmem:[%s4 + $0x38] sm:$0xff]
        %v705 = vld [vmem:[%s4 + $0x40] sm:$0xff]
        %v706 = vld [vmem:[%s4 + $0x48] sm:$0xff]
        %v707 = vld [vmem:[%s4 + $0x50] sm:$0xff]
        %v708 = vld [vmem:[%s4 + $0x58] sm:$0xff]
        %v709 = vld [vmem:[%s4 + $0x60] sm:$0xff]
        %v710 = vld [vmem:[%s4 + $0x68] sm:$0xff]
        %v711 = vld [vmem:[%s4 + $0x70] sm:$0xff]
        %v712 = vld [vmem:[%s4 + $0x78] sm:$0xff]
        %v713 = vld [vmem:[%s5] sm:$0x1]
        %v715 = vlaneseq
        %v716 = vshrl.u32 %v715, 7
        %v717 = vsub.s32 0, %v716
        %v718 = vrot.slane %v713, %v717
        %720 = vmatprep.subr.mxu0 0.0
        %721 = vmatpush1.msra.mxu0 %v712
        %722 = vmatprep.subr.mxu0 0.0
        %723 = vmatpush1.msra.mxu0 %v711
        %724 = vmatprep.subr.mxu0 0.0
        %725 = vmatpush1.msra.mxu0 %v710
        %726 = vmatprep.subr.mxu0 0.0
        %727 = vmatpush1.msra.mxu0 %v709
        %728 = vmatprep.subr.mxu0 0.0
        %729 = vmatpush1.msra.mxu0 %v708
        %730 = vmatprep.subr.mxu0 0.0
        %731 = vmatpush1.msra.mxu0 %v707
        %732 = vmatprep.subr.mxu0 0.0
        %733 = vmatpush1.msra.mxu0 %v706
        %734 = vmatprep.subr.mxu0 0.0
        %735 = vmatpush1.msra.mxu0 %v705
        %736 = vmatprep.subr.mxu0 0.0
        %737 = vmatpush1.msra.mxu0 %v704
        %738 = vmatprep.subr.mxu0 0.0
        %739 = vmatpush1.msra.mxu0 %v703
        %740 = vmatprep.subr.mxu0 0.0
        %741 = vmatpush1.msra.mxu0 %v702
        %742 = vmatprep.subr.mxu0 0.0
        %743 = vmatpush1.msra.mxu0 %v701
        %744 = vmatprep.subr.mxu0 0.0
        %745 = vmatpush1.msra.mxu0 %v700
        %746 = vmatprep.subr.mxu0 0.0
        %747 = vmatpush1.msra.mxu0 %v699
        %748 = vmatprep.subr.mxu0 0.0
        %749 = vmatpush1.msra.mxu0 %v698
        %750 = vmatprep.subr.mxu0 0.0
        %751 = vmatpush1.msra.mxu0 %v697
        %752 = vmatprep.subr.mxu0 0.0
        %753 = vmatpush2.msra.mxu0 0.0
        %754 = vmatprep.subr.mxu0 0.0
        %755 = vmatpush2.msra.mxu0 0.0
        %756 = vmatprep.subr.mxu0 0.0
        %757 = vmatpush2.msra.mxu0 0.0
        %758 = vmatprep.subr.mxu0 0.0
        %759 = vmatpush2.msra.mxu0 0.0
        %760 = vmatprep.subr.mxu0 0.0
        %761 = vmatpush2.msra.mxu0 0.0
        %762 = vmatprep.subr.mxu0 0.0
        %763 = vmatpush2.msra.mxu0 0.0
        %764 = vmatprep.subr.mxu0 0.0
        %765 = vmatpush2.msra.mxu0 0.0
        %766 = vmatprep.subr.mxu0 0.0
        %767 = vmatpush2.msra.mxu0 0.0
        %768 = vmatprep.subr.mxu0 0.0
        %769 = vmatpush2.msra.mxu0 0.0
        %770 = vmatprep.subr.mxu0 0.0
        %771 = vmatpush2.msra.mxu0 0.0
        %772 = vmatprep.subr.mxu0 0.0
        %773 = vmatpush2.msra.mxu0 0.0
        %774 = vmatprep.subr.mxu0 0.0
        %775 = vmatpush2.msra.mxu0 0.0
        %776 = vmatprep.subr.mxu0 0.0
        %777 = vmatpush2.msra.mxu0 0.0
        %778 = vmatprep.subr.mxu0 0.0
        %779 = vmatpush2.msra.mxu0 0.0
        %780 = vmatprep.subr.mxu0 0.0
        %781 = vmatpush2.msra.mxu0 0.0
        %782 = vmatprep.subr.mxu0 0.0
        %783 = vmatpush2.msra.mxu0 0.0
        %784 = vmatprep.mubr.f32.mxu0 0.0
        %785 = vmatmul.mubr.f32.gmra.mxu0 %v695
        %v786 = vpop.f32.mrf.mxu0
        %v787 = vadd.f32 %v718, %v786
        %v788 = vpop.f32.mrf.mxu0
        %789 = vmatprep.mubr.f32.mxu0 0.0
        %790 = vmatmul.mubr.f32.gmra.mxu0 %v696
        %v791 = vpop.f32.mrf.mxu0
        %v792 = vadd.f32 %v718, %v791
        %v793 = vpop.f32.mrf.mxu0
        %794 = vdwg.mxu0
        %vm795 = vcmask 64512
        %796 = vst.msk [vmem:[%s303] sm:$0xff] %vm795, %v787
        %797 = vst.msk [vmem:[%s303 + $0x8] sm:$0xff] %vm795, %v792
        %v798 = vsel %vm795, %v787, -inf
        %799 = vmax.xlane.f32.xlu0 %v798
        %v800 = vpop.xlane.xlu0 %799
        %v801 = vsel %vm795, %v792, -inf
        %802 = vmax.xlane.f32.xlu0 %v801
        %v803 = vpop.xlane.xlu0 %802
        %v804 = vsub.f32 %v787, %v800
        %v805 = vsub.f32 %v792, %v803
        %v806 = vmul.f32 %v804, 1.442695
        %v807 = vpow.pop %v806
        %v808 = vmul.f32 %v805, 1.442695
        %v809 = vpow.pop %v808
        %v810 = vsel %vm795, %v807, 0.0
        %811 = vadd.xlane.f32.xlu0 %v810
        %v812 = vpop.xlane.xlu0 %811
        %v813 = vsel %vm795, %v809, 0.0
        %814 = vadd.xlane.f32.xlu0 %v813
        %v815 = vpop.xlane.xlu0 %814
        %v816 = vrcp.pop %v812
        %v817 = vrcp.pop %v815
        %v818 = vmul.f32 %v807, %v816
        %v819 = vmul.f32 %v809, %v817
        %820 = vst.msk [vmem:[%s309] sm:$0xff] %vm795, %v818
        %821 = vst.msk [vmem:[%s309 + $0x8] sm:$0xff] %vm795, %v819
        %s822 = smul.u32 2, %s20
        %p823 = scmp.lt.s32.totalorder %s822, 3
        %s824 = scalar_select %p823, %s822, 3
        %s825 = smul.addr %s824, 8
        %s826 = scalar_lea.vmem %s6, %s825
        %s827 = smul.u32 2, %s20
        %p828 = scmp.lt.s32.totalorder %s827, 3
        %s829 = scalar_select %p828, %s827, 3
        %s830 = smul.addr %s829, 8
        %s831 = scalar_lea.vmem %s7, %s830
        // Predicated region
        $region49: #{tpu_custom_call.1} parent=43 // pred_check
          %p832 = pneg %p169
        $region50: #{tpu_custom_call.1} parent=43 // pred_check_branch
          %834 = sbr.rel (%p832) target = $region52
        $region51: #{tpu_custom_call.1} parent=43 // pred_region
          %s835 = smul.u32 2, %s20
        $region52: #{tpu_custom_call.1} parent=43 // pred_fallthru
          _
        // Predicated region
        $region53: #{tpu_custom_call.1} parent=43 // pred_check
          %p836 = pneg %p195
        $region54: #{tpu_custom_call.1} parent=43 // pred_check_branch
          %838 = sbr.rel (%p836) target = $region56
        $region55: #{tpu_custom_call.1} parent=43 // pred_region
          %s839 = smul.u32 2, %s20
        $region56: #{tpu_custom_call.1} parent=43 // pred_fallthru
          _
      $region44: #{tpu_custom_call.1} parent=5 // pred_fallthru
        _
      %p840 = scmp.le.s32.totalorder 2, %s15
      // Predicated region
      $region57: #{tpu_custom_call.1} parent=5 // pred_check
        %p841 = pneg %p840
      $region58: #{tpu_custom_call.1} parent=5 // pred_check_branch
        %843 = sbr.rel (%p841) target = $region60
      $region59: #{tpu_custom_call.1} parent=5 // pred_region
        %s844 = ssub.s32 %s15, 2
        // Predicated region
        $region61: #{tpu_custom_call.1} parent=59 // pred_check
          %p845 = pneg %p175
        $region62: #{tpu_custom_call.1} parent=59 // pred_check_branch
          %847 = sbr.rel (%p845) target = $region64
        $region63: #{tpu_custom_call.1} parent=59 // pred_region
          %s848 = smul.u32 2, %s21
          %p849 = scmp.lt.s32.totalorder %s848, 3
          %s850 = scalar_select %p849, %s848, 3
          %s851 = smul.addr %s850, 8
          %s852 = scalar_lea.vmem %s6, %s851
        $region64: #{tpu_custom_call.1} parent=59 // pred_fallthru
          _
        // Predicated region
        $region65: #{tpu_custom_call.1} parent=59 // pred_check
          %p853 = pneg %p201
        $region66: #{tpu_custom_call.1} parent=59 // pred_check_branch
          %855 = sbr.rel (%p853) target = $region68
        $region67: #{tpu_custom_call.1} parent=59 // pred_region
          %s856 = smul.u32 2, %s21
          %p857 = scmp.lt.s32.totalorder %s856, 3
          %s858 = scalar_select %p857, %s856, 3
          %s859 = smul.addr %s858, 8
          %s860 = scalar_lea.vmem %s7, %s859
        $region68: #{tpu_custom_call.1} parent=59 // pred_fallthru
          _
      $region60: #{tpu_custom_call.1} parent=5 // pred_fallthru
        _
    $region6: #{tpu_custom_call.1} parent=1 // loop_footer
      %s19 = sadd.s32 1, %s15
    $region7: #{tpu_custom_call.1} parent=1 // loop_footer_branch
      %14 = sbr.rel target = $region3
    $region8: #{tpu_custom_call.1} parent=1 // loop_exit
      _
    %861 = vsyncpa [#allocation3], 1
    %s862 = scalar_lea.sflag [#allocation3], 1
    %863 = vsyncpa %s862, 1

</llo_original>
